<compile_context>
chip_gen: v7x
topology: tpu7x:2x2x1
jax: 0.10.0
libtpu: 0.0.40
codegen_flags: <defaults>
</compile_context>

<pallas_src>
import functools

import jax
import jax.numpy as jnp
from jax import lax
from jax.experimental import pallas as pl
from jax.experimental.pallas import tpu as pltpu


def _round_up(x, m):
    return (x + m - 1) // m * m


def _cdiv(a, b):
    return (a + b - 1) // b


def _embed_mean_kernel(v_chunk, feat_ref, first_ref, last_ref, len_ref,
                       idx_ref, table_ref, out_ref):
    """One (batch-tile, vocab-tile) grid step of the fused embedding-mean.

    feat/first/last/len_ref: (n_v_tiles,) int32 SMEM (scalar prefetch):
        feature id of the vocab tile, first/last-tile-of-feature flags, and the
        sequence length of that feature (for the single finalize 1/L scale).
    idx_ref:   (b_blk, l_max) int32  this tile's feature's ids (fused-vocab
                                     offsets; L/batch padding = -1, matches nothing)
    table_ref: (v_tile, e_pad) bf16  vocab tile of the fused [V_total, E_pad] table
    out_ref:   (b_blk, e_pad) f32    this feature's output block; stays resident
                                     across the feature's vocab tiles and is
                                     accumulated into directly (no scratch).
    """
    vi = pl.program_id(1)

    @pl.when(first_ref[vi] == 1)
    def _():
        out_ref[...] = jnp.zeros_like(out_ref)

    idx = idx_ref[...]                                   # (b_blk, l_max)
    b_blk, l_max = idx.shape
    v_tile, e_pad = table_ref.shape
    n_chunks = v_tile // v_chunk
    row_base = vi * v_tile                               # fused-vocab row of tile

    # Hoisted out of the chunk loop (JAX does not CSE broadcast_in_dim).
    col_iota = lax.broadcasted_iota(jnp.int32, (b_blk, v_chunk), 1)

    def chunk_body(c, acc):
        start = c * v_chunk
        if not isinstance(start, int):
            start = pl.multiple_of(start, v_chunk)
        col_ids = col_iota + (row_base + start)
        counts = jnp.zeros((b_blk, v_chunk), jnp.float32)
        # TODO(synk): for large / heterogeneous per-feature sequence lengths,
        # bound this loop by the scalar-prefetched length (len_ref[vi]) with a
        # dynamic lax.fori_loop instead of the padded static l_max.
        for l in range(l_max):
            counts = counts + (idx[:, l:l + 1] == col_ids).astype(jnp.float32)
        tab = table_ref[pl.ds(start, v_chunk), :]        # (v_chunk, e_pad) bf16
        # Counts <= L are exact in bf16 -> bf16 MXU matmul, f32 accumulate.
        return acc + jnp.dot(counts.astype(jnp.bfloat16), tab,
                             preferred_element_type=jnp.float32)

    acc0 = jnp.zeros((b_blk, e_pad), jnp.float32)
    if n_chunks == 1:
        acc = chunk_body(0, acc0)
    else:
        acc = lax.fori_loop(0, n_chunks, chunk_body, acc0,
                            unroll=(n_chunks <= 4))

    out_ref[...] += acc

    # Apply the 1/L mean scale exactly once, on the feature's last vocab tile.
    @pl.when(last_ref[vi] == 1)
    def _():
        inv_len = 1.0 / len_ref[vi].astype(jnp.float32)
        out_ref[...] = out_ref[...] * inv_len


def fused_embed_mean(idx, tile_feat, tile_first, tile_last, tile_len, table,
                     *, v_tile, b_block=128, vmem_cap=64 << 20):
    """out[F, B, E_pad] = per-feature mean-pooled embeddings via one pallas_call.

    idx:   (F, B, l_max) int32 fused-vocab ids (-1 padding)
    table: (V_total_pad, E_pad) bf16 fused table
    tile_*: (n_v_tiles,) int32 per-vocab-tile metadata (scalar prefetch)
    """
    f, b, l_max = idx.shape
    v_pad, e_pad = table.shape
    assert v_pad % v_tile == 0 and v_tile % 128 == 0 and e_pad % 128 == 0
    n_v_tiles = v_pad // v_tile

    # 128-row batch tiles by default (fills v5e's 128^2 MXU; >=2 programs on the
    # parallel axis for v7x's two TensorCores once B >= 256).
    b_blk = min(b_block, _round_up(b, 8))
    b_pad = _round_up(b, b_blk)
    if b_pad != b:
        idx = jnp.pad(idx, ((0, 0), (0, b_pad - b), (0, 0)), constant_values=-1)

    # Counts chunk width: keep the live counts block register-resident.
    v_chunk = 256 if (v_tile % 256 == 0 and b_blk <= 128) else 128

    grid = (b_pad // b_blk, n_v_tiles)

    # Double-buffered table + idx + out blocks, with headroom.
    need = 2 * (v_tile * e_pad * 2 + b_blk * l_max * 4 + b_blk * e_pad * 4) + (1 << 20)
    vmem_limit = int(min(int(0.9 * vmem_cap), max(32 << 20, need + (4 << 20))))

    kernel = functools.partial(_embed_mean_kernel, v_chunk)

    out = pl.pallas_call(
        kernel,
        out_shape=jax.ShapeDtypeStruct((f, b_pad, e_pad), jnp.float32),
        grid_spec=pltpu.PrefetchScalarGridSpec(
            num_scalar_prefetch=4,
            grid=grid,
            in_specs=[
                # This vocab tile's feature's indices for this batch block.
                pl.BlockSpec((None, b_blk, l_max),
                             lambda bi, vi, feat, first, last, tl: (feat[vi], bi, 0)),
                # The vocab tile of the fused [V_total, E_pad] bf16 table.
                pl.BlockSpec((v_tile, e_pad),
                             lambda bi, vi, feat, first, last, tl: (vi, 0)),
            ],
            # This vocab tile's feature's output block (lane-dense E_pad=128k).
            out_specs=pl.BlockSpec((None, b_blk, e_pad),
                                   lambda bi, vi, feat, first, last, tl: (feat[vi], bi, 0)),
        ),
        compiler_params=pltpu.CompilerParams(
            dimension_semantics=("parallel", "arbitrary"),
            vmem_limit_bytes=vmem_limit,
        ),
    )(tile_feat, tile_first, tile_last, tile_len, idx, table)
    return out[:, :b, :]


class EmbeddingLayerPallas:
    """JAX/Pallas port of EmbeddingLayer + EmbeddingUnitLayer (meaning=True)."""

    def __init__(self, features, embedding_size, key, *, b_block=128):
        self.features = features
        self.embedding_size = embedding_size
        self.feature_names = list(features.keys())
        self.b_block = b_block

        # Per-table f32 parameters (features with shared_embed_name reuse a table).
        self.tables = {}
        for name, feature in features.items():
            if feature["shared_embed_name"] is not None:
                continue
            key, sub = jax.random.split(key)
            # torch.nn.init.normal_(weight, std=0.0001)
            self.tables[name] = 0.0001 * jax.random.normal(
                sub, (len(feature["vocab"]), embedding_size), dtype=jnp.float32)

        e_pad = _round_up(embedding_size, 128)           # lane-dense output columns
        self.e_pad = e_pad

        # Generation-aware vocab tile: derive from the chip's VMEM capacity
        # (64 MiB v7x vs 128 MiB v5e/v6e) instead of a hardcoded size.
        try:
            info = pltpu.get_tpu_info()
            vmem_cap = int(getattr(info, "vmem_capacity_bytes", 64 << 20))
        except Exception:  # not on a TPU at construction time
            vmem_cap = 64 << 20
        self.vmem_cap = vmem_cap
        table_budget = max(2 << 20, int(vmem_cap * 0.4))  # double-buffered bf16 tiles
        v_tile_vmem = max(128, (table_budget // (2 * e_pad * 2)) // 128 * 128)
        max_vocab = max(t.shape[0] for t in self.tables.values())
        self.v_tile = int(max(128, min(v_tile_vmem, _round_up(max_vocab, 128), 8192)))

        # Fused vocab layout: each feature gets a contiguous, v_tile-aligned row
        # range (shared tables duplicated per feature — forward-only layer), so
        # every vocab tile belongs to exactly ONE feature.
        self._row_span = {}
        tile_feat, tile_first, tile_last = [], [], []
        off = 0
        for f, name in enumerate(self.feature_names):
            feature = features[name]
            tname = name if feature["shared_embed_name"] is None else feature["shared_embed_name"]
            nrows = self.tables[tname].shape[0]
            n_tiles_f = _cdiv(nrows, self.v_tile)
            self._row_span[name] = (off, nrows)
            tile_feat += [f] * n_tiles_f
            tile_first += [1] + [0] * (n_tiles_f - 1)
            tile_last += [0] * (n_tiles_f - 1) + [1]
            off += n_tiles_f * self.v_tile
        self.v_pad = off
        self._tile_feat_list = tile_feat
        self.tile_feat = jnp.asarray(tile_feat, jnp.int32)
        self.tile_first = jnp.asarray(tile_first, jnp.int32)
        self.tile_last = jnp.asarray(tile_last, jnp.int32)

        # Fused [V_total, E_pad] table streamed as bf16 (counts are exact small
        # integers, so only table rounding ~0.4% rel enters the numerics).
        fused = jnp.zeros((self.v_pad, e_pad), jnp.float32)
        for name in self.feature_names:
            feature = features[name]
            tname = name if feature["shared_embed_name"] is None else feature["shared_embed_name"]
            r0, nr = self._row_span[name]
            fused = fused.at[r0:r0 + nr, :embedding_size].set(self.tables[tname])
        self.fused_table = fused.astype(jnp.bfloat16)

    def __call__(self, **kwargs):
        names = self.feature_names
        e = self.embedding_size
        l_max = max(int(kwargs[n].shape[1]) for n in names)

        idx_parts, feat_len = [], []
        for name in names:
            # NOTE: out-of-range ids contribute zero (they match no vocab row),
            # whereas torch.nn.Embedding would error; valid inputs are identical.
            x = kwargs[name].astype(jnp.int32)
            feat_len.append(int(x.shape[1]))
            r0, _ = self._row_span[name]
            xg = x + r0                                   # offset into fused vocab
            if x.shape[1] < l_max:
                # L-padding positions use -1 -> match no vocab row -> contribute 0.
                xg = jnp.pad(xg, ((0, 0), (0, l_max - x.shape[1])),
                             constant_values=-1)
            idx_parts.append(xg)
        idx = jnp.stack(idx_parts, axis=0)                # (F, B, l_max)

        # Per-vocab-tile sequence length (for the single finalize 1/L scale).
        tile_len = jnp.asarray([feat_len[f] for f in self._tile_feat_list], jnp.int32)

        out = fused_embed_mean(
            idx, self.tile_feat, self.tile_first, self.tile_last, tile_len,
            self.fused_table, v_tile=self.v_tile, b_block=self.b_block,
            vmem_cap=self.vmem_cap)                       # (F, B, e_pad) f32
        return {name: out[f, :, :e] for f, name in enumerate(names)}


def _reference(idx, table):
    # Pure-JAX reference: embedding lookup + mean over dim=1 (f32 table).
    return jnp.mean(jnp.take(table, idx, axis=0), axis=1)


if __name__ == "__main__":
    key = jax.random.PRNGKey(0)

    embedding_size = 32
    features = {
        "user_id":       {"vocab": list(range(50)), "shared_embed_name": None},
        "item_id":       {"vocab": list(range(80)), "shared_embed_name": None},
        "hist_item_ids": {"vocab": list(range(80)), "shared_embed_name": "item_id"},
    }

    key, k_layer = jax.random.split(key)
    layer = EmbeddingLayerPallas(features, embedding_size, k_layer)

    # Small deterministic inputs: batch=8, per-feature sequence lengths below.
    B = 8
    seq_lens = {"user_id": 4, "item_id": 4, "hist_item_ids": 8}
    inputs = {}
    for name, feature in features.items():
        key, k_in = jax.random.split(key)
        tname = name if feature["shared_embed_name"] is None else feature["shared_embed_name"]
        vocab_size = len(features[tname]["vocab"])
        inputs[name] = jax.random.randint(
            k_in, (B, seq_lens[name]), 0, vocab_size, dtype=jnp.int32)

    outputs = layer(**inputs)
    for name, out in outputs.items():
        jax.block_until_ready(out)

    # Validate against a pure-JAX f32 reference (kernel streams the table in
    # bf16 -> tolerance accounts for ~0.4% relative quantization of the table).
    for name, feature in features.items():
        tname = name if feature["shared_embed_name"] is None else feature["shared_embed_name"]
        ref = _reference(inputs[name], layer.tables[tname])
        got = outputs[name]
        assert got.shape == (B, embedding_size), (name, got.shape)
        assert jnp.allclose(got, ref, atol=3e-6, rtol=2e-2), f"mismatch for {name}"

    print("KERNEL_OK")
</pallas_src>

<mosaic_0001>
module attributes {stable_mosaic.version = 11 : i64} {
  func.func @_embed_mean_kernel(%arg0: i32, %arg1: i32, %arg2: memref<3xi32, #tpu.memory_space<smem>>, %arg3: memref<3xi32, #tpu.memory_space<smem>>, %arg4: memref<3xi32, #tpu.memory_space<smem>>, %arg5: memref<3xi32, #tpu.memory_space<smem>>, %arg6: memref<1x8x8xi32, #tpu.memory_space<vmem>>, %arg7: memref<128x128xbf16, #tpu.memory_space<vmem>>, %arg8: memref<1x8x128xf32, #tpu.memory_space<vmem>>) attributes {dimension_semantics = [#tpu.dimension_semantics<parallel>, #tpu.dimension_semantics<arbitrary>], iteration_bounds = array<i64: 1, 3>, scalar_prefetch = 4 : i64, scratch_operands = 0 : i64, tpu.core_type = #tpu.core_type<tc>, window_params = [{transform_indices = @transform_0, window_bounds = array<i64: 1, 8, 8>}, {transform_indices = @transform_1, window_bounds = array<i64: 128, 128>}, {transform_indices = @transform_2, window_bounds = array<i64: 1, 8, 128>}]} {
    %0 = arith.index_cast %arg1 : i32 to index
    %1 = memref.load %arg3[%0] : memref<3xi32, #tpu.memory_space<smem>>
    %c1_i32 = arith.constant 1 : i32
    %2 = arith.cmpi eq, %1, %c1_i32 : i32
    %3 = arith.extui %2 : i1 to i32
    %c0_i32 = arith.constant 0 : i32
    %4 = arith.cmpi ne, %3, %c0_i32 : i32
    scf.if %4 {
      %cst_15 = arith.constant 0.000000e+00 : f32
      %77 = vector.broadcast %cst_15 : f32 to vector<8x128xf32>
      %c0_16 = arith.constant 0 : index
      %c0_17 = arith.constant 0 : index
      %c0_18 = arith.constant 0 : index
      %78 = vector.load %arg8[%c0_16, %c0_17, %c0_18] : memref<1x8x128xf32, #tpu.memory_space<vmem>>, vector<1x8x128xf32>
      %79 = vector.shape_cast %78 : vector<1x8x128xf32> to vector<8x128xf32>
      %80 = vector.shape_cast %77 : vector<8x128xf32> to vector<1x8x128xf32>
      tpu.vector_store %arg8[%c0_16, %c0_17, %c0_18], %80 {strides = array<i32>} : memref<1x8x128xf32, #tpu.memory_space<vmem>>, vector<1x8x128xf32>,
    } else {
    }
    %c0 = arith.constant 0 : index
    %c0_0 = arith.constant 0 : index
    %c0_1 = arith.constant 0 : index
    %5 = vector.load %arg6[%c0, %c0_0, %c0_1] : memref<1x8x8xi32, #tpu.memory_space<vmem>>, vector<1x8x8xi32>
    %6 = vector.shape_cast %5 : vector<1x8x8xi32> to vector<8x8xi32>
    %c128_i32 = arith.constant 128 : i32
    %7 = arith.muli %arg1, %c128_i32 : i32
    %8 = tpu.iota {dimensions = array<i32: 1>} : vector<8x128xi32>
    %cst = arith.constant 0.000000e+00 : f32
    %9 = vector.broadcast %cst : f32 to vector<8x128xf32>
    %c0_i32_2 = arith.constant 0 : i32
    %10 = arith.addi %7, %c0_i32_2 : i32
    %11 = vector.broadcast %10 : i32 to vector<8x128xi32>
    %12 = arith.addi %8, %11 : vector<8x128xi32>
    %cst_3 = arith.constant 0.000000e+00 : f32
    %13 = vector.broadcast %cst_3 : f32 to vector<8x128xf32>
    %14 = vector.extract_strided_slice %6 {offsets = [0, 0], sizes = [8, 1], strides = [1, 1]} : vector<8x8xi32> to vector<8x1xi32>
    %15 = vector.broadcast %14 : vector<8x1xi32> to vector<8x128xi32>
    %16 = arith.cmpi eq, %15, %12 : vector<8x128xi32>
    %17 = arith.extui %16 : vector<8x128xi1> to vector<8x128xi32>
    %18 = arith.sitofp %17 : vector<8x128xi32> to vector<8x128xf32>
    %19 = arith.addf %13, %18 : vector<8x128xf32>
    %20 = vector.extract_strided_slice %6 {offsets = [0, 1], sizes = [8, 1], strides = [1, 1]} : vector<8x8xi32> to vector<8x1xi32>
    %21 = vector.broadcast %20 : vector<8x1xi32> to vector<8x128xi32>
    %22 = arith.cmpi eq, %21, %12 : vector<8x128xi32>
    %23 = arith.extui %22 : vector<8x128xi1> to vector<8x128xi32>
    %24 = arith.sitofp %23 : vector<8x128xi32> to vector<8x128xf32>
    %25 = arith.addf %19, %24 : vector<8x128xf32>
    %26 = vector.extract_strided_slice %6 {offsets = [0, 2], sizes = [8, 1], strides = [1, 1]} : vector<8x8xi32> to vector<8x1xi32>
    %27 = vector.broadcast %26 : vector<8x1xi32> to vector<8x128xi32>
    %28 = arith.cmpi eq, %27, %12 : vector<8x128xi32>
    %29 = arith.extui %28 : vector<8x128xi1> to vector<8x128xi32>
    %30 = arith.sitofp %29 : vector<8x128xi32> to vector<8x128xf32>
    %31 = arith.addf %25, %30 : vector<8x128xf32>
    %32 = vector.extract_strided_slice %6 {offsets = [0, 3], sizes = [8, 1], strides = [1, 1]} : vector<8x8xi32> to vector<8x1xi32>
    %33 = vector.broadcast %32 : vector<8x1xi32> to vector<8x128xi32>
    %34 = arith.cmpi eq, %33, %12 : vector<8x128xi32>
    %35 = arith.extui %34 : vector<8x128xi1> to vector<8x128xi32>
    %36 = arith.sitofp %35 : vector<8x128xi32> to vector<8x128xf32>
    %37 = arith.addf %31, %36 : vector<8x128xf32>
    %38 = vector.extract_strided_slice %6 {offsets = [0, 4], sizes = [8, 1], strides = [1, 1]} : vector<8x8xi32> to vector<8x1xi32>
    %39 = vector.broadcast %38 : vector<8x1xi32> to vector<8x128xi32>
    %40 = arith.cmpi eq, %39, %12 : vector<8x128xi32>
    %41 = arith.extui %40 : vector<8x128xi1> to vector<8x128xi32>
    %42 = arith.sitofp %41 : vector<8x128xi32> to vector<8x128xf32>
    %43 = arith.addf %37, %42 : vector<8x128xf32>
    %44 = vector.extract_strided_slice %6 {offsets = [0, 5], sizes = [8, 1], strides = [1, 1]} : vector<8x8xi32> to vector<8x1xi32>
    %45 = vector.broadcast %44 : vector<8x1xi32> to vector<8x128xi32>
    %46 = arith.cmpi eq, %45, %12 : vector<8x128xi32>
    %47 = arith.extui %46 : vector<8x128xi1> to vector<8x128xi32>
    %48 = arith.sitofp %47 : vector<8x128xi32> to vector<8x128xf32>
    %49 = arith.addf %43, %48 : vector<8x128xf32>
    %50 = vector.extract_strided_slice %6 {offsets = [0, 6], sizes = [8, 1], strides = [1, 1]} : vector<8x8xi32> to vector<8x1xi32>
    %51 = vector.broadcast %50 : vector<8x1xi32> to vector<8x128xi32>
    %52 = arith.cmpi eq, %51, %12 : vector<8x128xi32>
    %53 = arith.extui %52 : vector<8x128xi1> to vector<8x128xi32>
    %54 = arith.sitofp %53 : vector<8x128xi32> to vector<8x128xf32>
    %55 = arith.addf %49, %54 : vector<8x128xf32>
    %56 = vector.extract_strided_slice %6 {offsets = [0, 7], sizes = [8, 1], strides = [1, 1]} : vector<8x8xi32> to vector<8x1xi32>
    %57 = vector.broadcast %56 : vector<8x1xi32> to vector<8x128xi32>
    %58 = arith.cmpi eq, %57, %12 : vector<8x128xi32>
    %59 = arith.extui %58 : vector<8x128xi1> to vector<8x128xi32>
    %60 = arith.sitofp %59 : vector<8x128xi32> to vector<8x128xf32>
    %61 = arith.addf %55, %60 : vector<8x128xf32>
    %c0_4 = arith.constant 0 : index
    %c0_5 = arith.constant 0 : index
    %62 = vector.load %arg7[%c0_4, %c0_5] : memref<128x128xbf16, #tpu.memory_space<vmem>>, vector<128x128xbf16>
    %63 = arith.truncf %61 : vector<8x128xf32> to vector<8x128xbf16>
    %cst_6 = arith.constant dense<0.000000e+00> : vector<8x128xf32>
    %64 = tpu.matmul %63, %62, %cst_6 {dimension_numbers = #tpu.dot_dimension_numbers<[1], [0], [0], [1], [0, 0, 1, 1], [], []>} : vector<8x128xbf16>, vector<128x128xbf16>, vector<8x128xf32> -> vector<8x128xf32>
    %65 = arith.addf %9, %64 : vector<8x128xf32>
    %c0_7 = arith.constant 0 : index
    %c0_8 = arith.constant 0 : index
    %c0_9 = arith.constant 0 : index
    %66 = vector.load %arg8[%c0_7, %c0_8, %c0_9] : memref<1x8x128xf32, #tpu.memory_space<vmem>>, vector<1x8x128xf32>
    %67 = vector.shape_cast %66 : vector<1x8x128xf32> to vector<8x128xf32>
    %68 = arith.addf %67, %65 : vector<8x128xf32>
    %c0_10 = arith.constant 0 : index
    %c0_11 = arith.constant 0 : index
    %c0_12 = arith.constant 0 : index
    %69 = vector.load %arg8[%c0_10, %c0_11, %c0_12] : memref<1x8x128xf32, #tpu.memory_space<vmem>>, vector<1x8x128xf32>
    %70 = vector.shape_cast %69 : vector<1x8x128xf32> to vector<8x128xf32>
    %71 = vector.shape_cast %68 : vector<8x128xf32> to vector<1x8x128xf32>
    tpu.vector_store %arg8[%c0_10, %c0_11, %c0_12], %71 {strides = array<i32>} : memref<1x8x128xf32, #tpu.memory_space<vmem>>, vector<1x8x128xf32>,
    %72 = arith.index_cast %arg1 : i32 to index
    %73 = memref.load %arg4[%72] : memref<3xi32, #tpu.memory_space<smem>>
    %c1_i32_13 = arith.constant 1 : i32
    %74 = arith.cmpi eq, %73, %c1_i32_13 : i32
    %75 = arith.extui %74 : i1 to i32
    %c0_i32_14 = arith.constant 0 : i32
    %76 = arith.cmpi ne, %75, %c0_i32_14 : i32
    scf.if %76 {
      %77 = arith.index_cast %arg1 : i32 to index
      %78 = memref.load %arg5[%77] : memref<3xi32, #tpu.memory_space<smem>>
      %79 = arith.sitofp %78 : i32 to f32
      %cst_15 = arith.constant 1.000000e+00 : f32
      %80 = arith.divf %cst_15, %79 : f32
      %c0_16 = arith.constant 0 : index
      %c0_17 = arith.constant 0 : index
      %c0_18 = arith.constant 0 : index
      %81 = vector.load %arg8[%c0_16, %c0_17, %c0_18] : memref<1x8x128xf32, #tpu.memory_space<vmem>>, vector<1x8x128xf32>
      %82 = vector.shape_cast %81 : vector<1x8x128xf32> to vector<8x128xf32>
      %83 = vector.broadcast %80 : f32 to vector<8x128xf32>
      %84 = arith.mulf %82, %83 : vector<8x128xf32>
      %c0_19 = arith.constant 0 : index
      %c0_20 = arith.constant 0 : index
      %c0_21 = arith.constant 0 : index
      %85 = vector.load %arg8[%c0_19, %c0_20, %c0_21] : memref<1x8x128xf32, #tpu.memory_space<vmem>>, vector<1x8x128xf32>
      %86 = vector.shape_cast %85 : vector<1x8x128xf32> to vector<8x128xf32>
      %87 = vector.shape_cast %84 : vector<8x128xf32> to vector<1x8x128xf32>
      tpu.vector_store %arg8[%c0_19, %c0_20, %c0_21], %87 {strides = array<i32>} : memref<1x8x128xf32, #tpu.memory_space<vmem>>, vector<1x8x128xf32>,
    } else {
    }
    return
  }
  func.func @transform_0(%arg0: i32, %arg1: i32, %arg2: memref<3xi32, #tpu.memory_space<smem>>, %arg3: memref<3xi32, #tpu.memory_space<smem>>, %arg4: memref<3xi32, #tpu.memory_space<smem>>, %arg5: memref<3xi32, #tpu.memory_space<smem>>) -> (i32, i32, i32) {
    %0 = arith.index_cast %arg1 : i32 to index
    %1 = memref.load %arg2[%0] : memref<3xi32, #tpu.memory_space<smem>>
    %c0_i32 = arith.constant 0 : i32
    %c0_i32_0 = arith.constant 0 : i32
    return %1, %arg0, %c0_i32 : i32, i32, i32
  }
  func.func @transform_1(%arg0: i32, %arg1: i32, %arg2: memref<3xi32, #tpu.memory_space<smem>>, %arg3: memref<3xi32, #tpu.memory_space<smem>>, %arg4: memref<3xi32, #tpu.memory_space<smem>>, %arg5: memref<3xi32, #tpu.memory_space<smem>>) -> (i32, i32) {
    %c0_i32 = arith.constant 0 : i32
    %c0_i32_0 = arith.constant 0 : i32
    return %arg1, %c0_i32 : i32, i32
  }
  func.func @transform_2(%arg0: i32, %arg1: i32, %arg2: memref<3xi32, #tpu.memory_space<smem>>, %arg3: memref<3xi32, #tpu.memory_space<smem>>, %arg4: memref<3xi32, #tpu.memory_space<smem>>, %arg5: memref<3xi32, #tpu.memory_space<smem>>) -> (i32, i32, i32) {
    %0 = arith.index_cast %arg1 : i32 to index
    %1 = memref.load %arg2[%0] : memref<3xi32, #tpu.memory_space<smem>>
    %c0_i32 = arith.constant 0 : i32
    %c0_i32_0 = arith.constant 0 : i32
    return %1, %arg0, %c0_i32 : i32, i32, i32
  }
}

</mosaic_0001>

<llo_original>
// kernel: tpu_custom_call.1
$region0: #{tpu_custom_call.1}
  #allocation0 [shape = 'u32[]', space=smem, size = 0x4, offset = 0x4, fixed_abs, tag = 'smem constant byte address 0x4 - core index']
  #allocation1 [shape = 'u32[144,128]{1,0:T(1,128)}', space=vmem, size = 0x12000, scoped, tag = 'internal scratch']
  #allocation2 [shape = 's32[1]{0}', space=sflag, size = 0x4, scoped, tag = 'scoped memory for tpu_custom_call.1']
  #allocation3 [shape = 'u8[512]{0}', space=smem, size = 0x200, scoped, tag = 'prefetched SMEM operand 0']
  #allocation4 [shape = 'u8[512]{0}', space=smem, size = 0x200, scoped, tag = 'prefetched SMEM operand 1']
  #allocation5 [shape = 'u8[512]{0}', space=smem, size = 0x200, scoped, tag = 'prefetched SMEM operand 2']
  #allocation6 [shape = 'u8[512]{0}', space=smem, size = 0x200, scoped, tag = 'prefetched SMEM operand 3']
  %s0 = inlined_call_operand.hbm [shape: s32[3], index: 0, kind: input, shape index: {}]
  %s1 = inlined_call_operand.vmem [shape: s32[3], index: 1, kind: input, shape index: {}]
  %s2 = inlined_call_operand.vmem [shape: s32[3], index: 2, kind: input, shape index: {}]
  %s3 = inlined_call_operand.vmem [shape: s32[3], index: 3, kind: input, shape index: {}]
  %s4 = inlined_call_operand.hbm [shape: s32[3,8,8], index: 4, kind: input, shape index: {}]
  %s5 = inlined_call_operand.hbm [shape: bf16[384,128], index: 5, kind: input, shape index: {}]
  %s6 = inlined_call_operand.hbm [shape: f32[3,8,128], index: 6, kind: output, shape index: {}]
  %s7 = sld [smem:[#allocation0]]
  $region57: #{tpu_custom_call.1} parent=0
    _
  %s9 = ssub.s32 1, %s7
  %s10 = scalar_select 0, %s9, %s7
  %12 = dma.hbm_to_smem %s0, 16, [#allocation3], [#allocation2]
  %s13 = sshll.u32 %s1, 4
  %s14 = int_to_ptr.vmem [resolvable:$true] %s13
  %16 = dma.vmem_to_smem %s14, 16, [#allocation4], [#allocation2]
  %s17 = sshll.u32 %s2, 4
  %s18 = int_to_ptr.vmem [resolvable:$true] %s17
  %20 = dma.vmem_to_smem %s18, 16, [#allocation5], [#allocation2]
  %s21 = sshll.u32 %s3, 4
  %s22 = int_to_ptr.vmem [resolvable:$true] %s21
  %24 = dma.vmem_to_smem %s22, 16, [#allocation6], [#allocation2]
  %25 = dma.done [#allocation2], 64
  %26 = sfence
  $region1: #{tpu_custom_call.1} parent=0
    #allocation7 [shape = 'u8[8192]{0}', space=vmem, size = 0x2000, scoped, tag = 'input window, operand 4']
    #allocation8 [shape = 's32[2]{0}', space=sflag, size = 0x8, scoped, tag = 'scoped memory for tpu_custom_call.1']
    #allocation9 [shape = 's32[2]{0}', space=sflag, size = 0x8, scoped, tag = 'scoped memory for tpu_custom_call.1']
    #allocation10 [shape = 'u8[65536]{0}', space=vmem, size = 0x10000, scoped, tag = 'input window, operand 5']
    #allocation11 [shape = 's32[2]{0}', space=sflag, size = 0x8, scoped, tag = 'scoped memory for tpu_custom_call.1']
    #allocation12 [shape = 'u8[8192]{0}', space=vmem, size = 0x2000, scoped, tag = 'output window, operand 0']
    %27 = vsyncpa [#allocation8], 0
    %s28 = scalar_lea.sflag [#allocation8], 1
    %29 = vsyncpa %s28, 0
    %30 = vsyncpa [#allocation11], 0
    %s31 = scalar_lea.sflag [#allocation11], 1
    %32 = vsyncpa %s31, 0
    %33 = vsyncpa [#allocation9], 0
    %s34 = scalar_lea.sflag [#allocation9], 1
    %35 = vsyncpa %s34, 0
    loop: start=0, step=1, limit=5
    $region2: #{tpu_custom_call.1} parent=1 // loop_pre_header
      _
    $region3: #{tpu_custom_call.1} parent=1 // loop_header
      %s37 = sphi 0, %s41
      %p38 = scmp.ge.s32.totalorder %s37, 5
      %s44 = sphi 0, %s56
      %s45 = sphi 0, %s52
      %s46 = sphi 0, %s44
      %s47 = sphi 0, %s45
      %s48 = sphi 0, %s46
      %s49 = sphi 0, %s47
      %s63 = sphi 0, %s65
      %s66 = sphi 0, %s63
      %s67 = sphi 0, %s66
      %s83 = sphi 0, %s67
      %s89 = sphi 0, %s91
      %s92 = sphi 0, %s89
      %s93 = sphi 0, %s92
      %s109 = sphi 0, %s93
      %s119 = sphi 0, %s121
      %s122 = sphi 0, %s119
      %s123 = sphi 0, %s122
      %s139 = sphi 0, %s123
    $region4: #{tpu_custom_call.1} parent=1 // loop_header_branch
      %40 = sbr.rel (%p38) target = $region8
    $region5: #{tpu_custom_call.1} parent=1 // loop_body
      %s42 = ssub.s32 %s37, 1
      %s43 = ssub.s32 %s37, 2
      %s50 = sadd.s32 1, %s45
      %p51 = scmp.ge.s32.totalorder %s50, 3
      %s52 = scalar_select %p51, 0, %s50
      %s53 = sadd.s32 1, %s44
      %s54 = scalar_select %p51, %s53, %s44
      %p55 = scmp.ge.s32.totalorder %s54, 1
      %s56 = scalar_select %p55, 0, %s54
      %s57 = sld [smem:[#allocation3 + %s45]]
      %s58 = sld [smem:[#allocation3 + %s52]]
      %s59 = ssub.s32 %s57, %s58
      %s60 = ssub.s32 %s44, %s56
      %s61 = sor.u32 %s59, %s60
      %p62 = scmp.eq.s32.totalorder %s61, 0
      %s64 = sadd.s32 %s63, 1
      %s65 = scalar_select %p62, %s63, %s64
      %p68 = pneg %p62
      %p69 = scmp.eq.s32.totalorder %s37, 2
      %p70 = por %p68, %p69
      %p71 = scmp.ne.s32.totalorder %s63, %s66
      %p72 = scmp.eq.s32.totalorder %s37, 0
      %p73 = por %p71, %p72
      %p74 = scmp.ne.s32.totalorder %s63, %s66
      %p75 = scmp.eq.s32.totalorder %s42, 2
      %p76 = por %p74, %p75
      %p77 = scmp.ne.s32.totalorder %s66, %s67
      %p78 = scmp.eq.s32.totalorder %s42, 0
      %p79 = por %p77, %p78
      %p80 = scmp.ne.s32.totalorder %s66, %s67
      %p81 = scmp.eq.s32.totalorder %s43, 2
      %p82 = por %p80, %p81
      %p84 = scmp.ne.s32.totalorder %s67, %s83
      %p85 = scmp.eq.s32.totalorder %s43, 0
      %p86 = por %p84, %p85
      %s87 = ssub.s32 %s45, %s52
      %p88 = scmp.eq.s32.totalorder %s87, 0
      %s90 = sadd.s32 %s89, 1
      %s91 = scalar_select %p88, %s89, %s90
      %p94 = pneg %p88
      %p95 = scmp.eq.s32.totalorder %s37, 2
      %p96 = por %p94, %p95
      %p97 = scmp.ne.s32.totalorder %s89, %s92
      %p98 = scmp.eq.s32.totalorder %s37, 0
      %p99 = por %p97, %p98
      %p100 = scmp.ne.s32.totalorder %s89, %s92
      %p101 = scmp.eq.s32.totalorder %s42, 2
      %p102 = por %p100, %p101
      %p103 = scmp.ne.s32.totalorder %s92, %s93
      %p104 = scmp.eq.s32.totalorder %s42, 0
      %p105 = por %p103, %p104
      %p106 = scmp.ne.s32.totalorder %s92, %s93
      %p107 = scmp.eq.s32.totalorder %s43, 2
      %p108 = por %p106, %p107
      %p110 = scmp.ne.s32.totalorder %s93, %s109
      %p111 = scmp.eq.s32.totalorder %s43, 0
      %p112 = por %p110, %p111
      %s113 = sld [smem:[#allocation3 + %s45]]
      %s114 = sld [smem:[#allocation3 + %s52]]
      %s115 = ssub.s32 %s113, %s114
      %s116 = ssub.s32 %s44, %s56
      %s117 = sor.u32 %s115, %s116
      %p118 = scmp.eq.s32.totalorder %s117, 0
      %s120 = sadd.s32 %s119, 1
      %s121 = scalar_select %p118, %s119, %s120
      %p124 = pneg %p118
      %p125 = scmp.eq.s32.totalorder %s37, 2
      %p126 = por %p124, %p125
      %p127 = scmp.ne.s32.totalorder %s119, %s122
      %p128 = scmp.eq.s32.totalorder %s37, 0
      %p129 = por %p127, %p128
      %p130 = scmp.ne.s32.totalorder %s119, %s122
      %p131 = scmp.eq.s32.totalorder %s42, 2
      %p132 = por %p130, %p131
      %p133 = scmp.ne.s32.totalorder %s122, %s123
      %p134 = scmp.eq.s32.totalorder %s42, 0
      %p135 = por %p133, %p134
      %p136 = scmp.ne.s32.totalorder %s122, %s123
      %p137 = scmp.eq.s32.totalorder %s43, 2
      %p138 = por %p136, %p137
      %p140 = scmp.ne.s32.totalorder %s123, %s139
      %p141 = scmp.eq.s32.totalorder %s43, 0
      %p142 = por %p140, %p141
      %p143 = scmp.le.s32.totalorder 1, %s37
      %p144 = scmp.lt.s32.totalorder %s37, 4
      %p145 = pnand %p143, %p144
      %p146 = pneg %p145
      // Predicated region
      $region9: #{tpu_custom_call.1} parent=5 // pred_check
        _
      $region10: #{tpu_custom_call.1} parent=5 // pred_check_branch
        %148 = sbr.rel (%p145) target = $region12
      $region11: #{tpu_custom_call.1} parent=5 // pred_region
        %s149 = ssub.s32 %s37, 1
      $region12: #{tpu_custom_call.1} parent=5 // pred_fallthru
        _
      %p150 = scmp.lt.s32.totalorder %s37, 3
      // Predicated region
      $region13: #{tpu_custom_call.1} parent=5 // pred_check
        %p151 = pneg %p150
      $region14: #{tpu_custom_call.1} parent=5 // pred_check_branch
        %153 = sbr.rel (%p151) target = $region16
      $region15: #{tpu_custom_call.1} parent=5 // pred_region
        // Predicated region
        $region17: #{tpu_custom_call.1} parent=15 // pred_check
          %p154 = pneg %p73
        $region18: #{tpu_custom_call.1} parent=15 // pred_check_branch
          %156 = sbr.rel (%p154) target = $region20
        $region19: #{tpu_custom_call.1} parent=15 // pred_region
          %s157 = sand.u32 %s63, 1
          %s158 = scalar_lea.sflag [#allocation8], %s157
          %s159 = sand.u32 %s63, 1
          %s160 = smul.addr %s159, 8
          %s161 = scalar_lea.vmem [#allocation7], %s160
          %s162 = sld [smem:[#allocation3 + %s45]]
          %s164 = ssub.s32 128, 128
          %165 = vsyncadd %s158, %s164
          %s166 = sadd.s32 %s44, %s162
          %s167 = smul.addr %s166, 128
          %s168 = scalar_lea.hbm %s4, %s167
          %s170 = sshll.u32 %s161, 4
          %s171 = int_to_ptr.vmem [resolvable:$true] %s170
          %173 = dma.hbm_to_vmem [thread:$0]  %s168, 128, %s171, %s158
        $region20: #{tpu_custom_call.1} parent=15 // pred_fallthru
          _
        // Predicated region
        $region21: #{tpu_custom_call.1} parent=15 // pred_check
          %p174 = pneg %p99
        $region22: #{tpu_custom_call.1} parent=15 // pred_check_branch
          %176 = sbr.rel (%p174) target = $region24
        $region23: #{tpu_custom_call.1} parent=15 // pred_region
          %s177 = sand.u32 %s89, 1
          %s178 = scalar_lea.sflag [#allocation11], %s177
          %s179 = sand.u32 %s89, 1
          %s180 = smul.addr %s179, 64
          %s181 = scalar_lea.vmem [#allocation10], %s180
          %s182 = smul.u32 16, %s45
          %s184 = ssub.s32 1024, 1024
          %185 = vsyncadd %s178, %s184
          %s186 = smul.addr %s182, 64
          %s187 = scalar_lea.hbm %s5, %s186
          %s188 = sshll.u32 %s181, 4
          %s189 = int_to_ptr.vmem [resolvable:$true] %s188
          %194 = dma.hbm_to_vmem [thread:$0]  %s187, 1024, %s189, %s178, 64, 64, 4
        $region24: #{tpu_custom_call.1} parent=15 // pred_fallthru
          _
      $region16: #{tpu_custom_call.1} parent=5 // pred_fallthru
        _
      %p195 = scmp.le.s32.totalorder 1, %s37
      %p196 = scmp.lt.s32.totalorder %s37, 4
      %p197 = pnand %p195, %p196
      %p198 = pneg %p197
      // Predicated region
      $region25: #{tpu_custom_call.1} parent=5 // pred_check
        _
      $region26: #{tpu_custom_call.1} parent=5 // pred_check_branch
        %200 = sbr.rel (%p197) target = $region28
      $region27: #{tpu_custom_call.1} parent=5 // pred_region
        %s201 = ssub.s32 %s37, 1
        %s202 = sand.u32 %s66, 1
        %s203 = scalar_lea.sflag [#allocation8], %s202
        %s204 = sand.u32 %s66, 1
        %s205 = smul.addr %s204, 8
        %s206 = scalar_lea.vmem [#allocation7], %s205
        // Predicated region
        $region29: #{tpu_custom_call.1} parent=27 // pred_check
          %p207 = pneg %p79
        $region30: #{tpu_custom_call.1} parent=27 // pred_check_branch
          %209 = sbr.rel (%p207) target = $region32
        $region31: #{tpu_custom_call.1} parent=27 // pred_region
          %210 = dma.done %s203, 128
        $region32: #{tpu_custom_call.1} parent=27 // pred_fallthru
          _
        %s211 = sand.u32 %s92, 1
        %s212 = scalar_lea.sflag [#allocation11], %s211
        %s213 = sand.u32 %s92, 1
        %s214 = smul.addr %s213, 64
        %s215 = scalar_lea.vmem [#allocation10], %s214
        // Predicated region
        $region33: #{tpu_custom_call.1} parent=27 // pred_check
          %p216 = pneg %p105
        $region34: #{tpu_custom_call.1} parent=27 // pred_check_branch
          %218 = sbr.rel (%p216) target = $region36
        $region35: #{tpu_custom_call.1} parent=27 // pred_region
          %219 = dma.done %s212, 1024
        $region36: #{tpu_custom_call.1} parent=27 // pred_fallthru
          _
        %s220 = sand.u32 %s66, 1
        %s221 = scalar_lea.sflag [#allocation8], %s220
        %s222 = sand.u32 %s66, 1
        %s223 = smul.addr %s222, 8
        %s224 = scalar_lea.vmem [#allocation7], %s223
        %p225 = pneg %p79
        %p226 = pneg %p76
        %s227 = sand.u32 %s92, 1
        %s228 = scalar_lea.sflag [#allocation11], %s227
        %s229 = sand.u32 %s92, 1
        %s230 = smul.addr %s229, 64
        %s231 = scalar_lea.vmem [#allocation10], %s230
        %p232 = pneg %p105
        %p233 = pneg %p102
        %p234 = pneg %p135
        %p235 = pneg %p132
        %s236 = sand.u32 %s122, 1
        %s237 = scalar_lea.sflag [#allocation9], %s236
        %s238 = sand.u32 %s122, 1
        %s239 = smul.addr %s238, 8
        %s240 = scalar_lea.vmem [#allocation12], %s239
        %s241 = sld [smem:[#allocation3 + %s47]]
        %s242 = smul.u32 16, %s47
        %s243 = sld [smem:[#allocation3 + %s47]]
        %s245 = sld [smem:[#allocation4 + %s47]]
        %p246 = scmp.eq.s32.totalorder %s245, 1
        // Predicated region
        $region37: #{tpu_custom_call.1} parent=27 // pred_check
          %p247 = pneg %p246
        $region38: #{tpu_custom_call.1} parent=27 // pred_check_branch
          %249 = sbr.rel (%p247) target = $region40
        $region39: #{tpu_custom_call.1} parent=27 // pred_region
          %250 = vst [vmem:[%s240] sm:$0xff] 0.0
        $region40: #{tpu_custom_call.1} parent=27 // pred_fallthru
          _
        %v251 = vld [vmem:[%s206] sm:$0xff]
        %s252 = smul.u32 %s47, 128
        %v253 = vlaneseq
        %v254 = vand.u32 %v253, 127
        %v255 = vstv %s252
        %v256 = vadd.s32 %v254, %v255
        %257 = vset.pattern.permute.xlu0 0
        %258 = vperm.xlu0 %257, %v251
        %v259 = vpop.permute.xlu0 %258
        %vm260 = vcmp.eq.s32.totalorder %v259, %v256
        %v261 = vsel %vm260, 1, 0
        %v262 = vcvt.s32.f32 %v261
        %v263 = vadd.f32 %v262, 0.0
        %264 = vset.pattern.permute.xlu0 1
        %265 = vperm.xlu0 %264, %v251
        %v266 = vpop.permute.xlu0 %265
        %vm267 = vcmp.eq.s32.totalorder %v266, %v256
        %v268 = vsel %vm267, 1, 0
        %v269 = vcvt.s32.f32 %v268
        %v270 = vadd.f32 %v263, %v269
        %271 = vset.pattern.permute.xlu0 2
        %272 = vperm.xlu0 %271, %v251
        %v273 = vpop.permute.xlu0 %272
        %vm274 = vcmp.eq.s32.totalorder %v273, %v256
        %v275 = vsel %vm274, 1, 0
        %v276 = vcvt.s32.f32 %v275
        %v277 = vadd.f32 %v270, %v276
        %278 = vset.pattern.permute.xlu0 3
        %279 = vperm.xlu0 %278, %v251
        %v280 = vpop.permute.xlu0 %279
        %vm281 = vcmp.eq.s32.totalorder %v280, %v256
        %v282 = vsel %vm281, 1, 0
        %v283 = vcvt.s32.f32 %v282
        %v284 = vadd.f32 %v277, %v283
        %285 = vset.pattern.permute.xlu0 4
        %286 = vperm.xlu0 %285, %v251
        %v287 = vpop.permute.xlu0 %286
        %vm288 = vcmp.eq.s32.totalorder %v287, %v256
        %v289 = vsel %vm288, 1, 0
        %v290 = vcvt.s32.f32 %v289
        %v291 = vadd.f32 %v284, %v290
        %292 = vset.pattern.permute.xlu0 5
        %293 = vperm.xlu0 %292, %v251
        %v294 = vpop.permute.xlu0 %293
        %vm295 = vcmp.eq.s32.totalorder %v294, %v256
        %v296 = vsel %vm295, 1, 0
        %v297 = vcvt.s32.f32 %v296
        %v298 = vadd.f32 %v291, %v297
        %299 = vset.pattern.permute.xlu0 6
        %300 = vperm.xlu0 %299, %v251
        %v301 = vpop.permute.xlu0 %300
        %vm302 = vcmp.eq.s32.totalorder %v301, %v256
        %v303 = vsel %vm302, 1, 0
        %v304 = vcvt.s32.f32 %v303
        %v305 = vadd.f32 %v298, %v304
        %306 = vset.pattern.permute.xlu0 7
        %307 = vperm.xlu0 %306, %v251
        %v308 = vpop.permute.xlu0 %307
        %vm309 = vcmp.eq.s32.totalorder %v308, %v256
        %v310 = vsel %vm309, 1, 0
        %v311 = vcvt.s32.f32 %v310
        %v312 = vadd.f32 %v305, %v311
        %v313 = vld [vmem:[%s215] sm:$0xf]
        %v314 = vld [vmem:[%s215 + $0x4] sm:$0xf]
        %v315 = vld [vmem:[%s215 + $0x8] sm:$0xf]
        %v316 = vld [vmem:[%s215 + $0xc] sm:$0xf]
        %v317 = vld [vmem:[%s215 + $0x10] sm:$0xf]
        %v318 = vld [vmem:[%s215 + $0x14] sm:$0xf]
        %v319 = vld [vmem:[%s215 + $0x18] sm:$0xf]
        %v320 = vld [vmem:[%s215 + $0x1c] sm:$0xf]
        %v321 = vld [vmem:[%s215 + $0x20] sm:$0xf]
        %v322 = vld [vmem:[%s215 + $0x24] sm:$0xf]
        %v323 = vld [vmem:[%s215 + $0x28] sm:$0xf]
        %v324 = vld [vmem:[%s215 + $0x2c] sm:$0xf]
        %v325 = vld [vmem:[%s215 + $0x30] sm:$0xf]
        %v326 = vld [vmem:[%s215 + $0x34] sm:$0xf]
        %v327 = vld [vmem:[%s215 + $0x38] sm:$0xf]
        %v328 = vld [vmem:[%s215 + $0x3c] sm:$0xf]
        %v329 = vpack.c.bf16 %v312, %v312
        %v346 = vunpack.c.l.b16 %v313
        %v347 = vunpack.c.l.b16 %v314
        %v348 = vunpack.c.l.b16 %v315
        %v349 = vunpack.c.l.b16 %v316
        %v350 = vunpack.c.l.b16 %v317
        %v351 = vunpack.c.l.b16 %v318
        %v352 = vunpack.c.l.b16 %v319
        %v353 = vunpack.c.l.b16 %v320
        %v354 = vunpack.c.l.b16 %v321
        %v355 = vunpack.c.l.b16 %v322
        %v356 = vunpack.c.l.b16 %v323
        %v357 = vunpack.c.l.b16 %v324
        %v358 = vunpack.c.l.b16 %v325
        %v359 = vunpack.c.l.b16 %v326
        %v360 = vunpack.c.l.b16 %v327
        %v361 = vunpack.c.l.b16 %v328
        %v362 = vpack.c.b16 %v347, %v346
        %v363 = vpack.c.b16 %v349, %v348
        %v364 = vpack.c.b16 %v351, %v350
        %v365 = vpack.c.b16 %v353, %v352
        %v366 = vpack.c.b16 %v355, %v354
        %v367 = vpack.c.b16 %v357, %v356
        %v368 = vpack.c.b16 %v359, %v358
        %v369 = vpack.c.b16 %v361, %v360
        %378 = vmatprep.subr.bf16.mxu0 0
        %379 = vmatpush1.bf16.msra.mxu0 %v362
        %380 = vmatprep.subr.bf16.mxu0 0
        %381 = vmatpush1.bf16.msra.mxu0 %v363
        %382 = vmatprep.subr.bf16.mxu0 0
        %383 = vmatpush1.bf16.msra.mxu0 %v364
        %384 = vmatprep.subr.bf16.mxu0 0
        %385 = vmatpush1.bf16.msra.mxu0 %v365
        %386 = vmatprep.subr.bf16.mxu0 0
        %387 = vmatpush1.bf16.msra.mxu0 %v366
        %388 = vmatprep.subr.bf16.mxu0 0
        %389 = vmatpush1.bf16.msra.mxu0 %v367
        %390 = vmatprep.subr.bf16.mxu0 0
        %391 = vmatpush1.bf16.msra.mxu0 %v368
        %392 = vmatprep.subr.bf16.mxu0 0
        %393 = vmatpush1.bf16.msra.mxu0 %v369
        %394 = vmatprep.subr.bf16.mxu0 0
        %395 = vmatpush1.bf16.msra.mxu0 0
        %396 = vmatprep.subr.bf16.mxu0 0
        %397 = vmatpush1.bf16.msra.mxu0 0
        %398 = vmatprep.subr.bf16.mxu0 0
        %399 = vmatpush1.bf16.msra.mxu0 0
        %400 = vmatprep.subr.bf16.mxu0 0
        %401 = vmatpush1.bf16.msra.mxu0 0
        %402 = vmatprep.subr.bf16.mxu0 0
        %403 = vmatpush1.bf16.msra.mxu0 0
        %404 = vmatprep.subr.bf16.mxu0 0
        %405 = vmatpush1.bf16.msra.mxu0 0
        %406 = vmatprep.subr.bf16.mxu0 0
        %407 = vmatpush1.bf16.msra.mxu0 0
        %408 = vmatprep.subr.bf16.mxu0 0
        %409 = vmatpush1.bf16.msra.mxu0 0
        %410 = vmatprep.mubr.bf16.mxu0 0
        %411 = vmatmul.mubr.bf16.gmra.mrb[0].mxu0 %v329
        %v412 = vpop.f32.mrb[0].mxu0
        %v413 = vadd.f32 0.0, %v412
        %v414 = vpop.f32.mrb[0].mxu0
        %v415 = vpop.f32.mrb[0].mxu0
        %v416 = vpop.f32.mrb[0].mxu0
        %417 = vdwg.mxu0
        %v418 = vld [vmem:[%s240] sm:$0xff]
        %v419 = vadd.f32 %v418, %v413
        %420 = vst [vmem:[%s240] sm:$0xff] %v419
        %s421 = sld [smem:[#allocation5 + %s47]]
        %p422 = scmp.eq.s32.totalorder %s421, 1
        // Predicated region
        $region41: #{tpu_custom_call.1} parent=27 // pred_check
          %p423 = pneg %p422
        $region42: #{tpu_custom_call.1} parent=27 // pred_check_branch
          %425 = sbr.rel (%p423) target = $region44
        $region43: #{tpu_custom_call.1} parent=27 // pred_region
          %s426 = sld [smem:[#allocation6 + %s47]]
          %s427 = scvt.s32.f32 %s426
          %v428 = vstv %s427
          %v429 = vrcp.pop %v428
          %s430 = vtos %v429
          %v431 = vld [vmem:[%s240] sm:$0xff]
          %v432 = vstv %s430
          %v433 = vmul.f32 %v431, %v432
          %434 = vst [vmem:[%s240] sm:$0xff] %v433
        $region44: #{tpu_custom_call.1} parent=27 // pred_fallthru
          _
        %s435 = sand.u32 %s122, 1
        %s436 = scalar_lea.sflag [#allocation9], %s435
        %s437 = sand.u32 %s122, 1
        %s438 = smul.addr %s437, 8
        %s439 = scalar_lea.vmem [#allocation12], %s438
        // Predicated region
        $region45: #{tpu_custom_call.1} parent=27 // pred_check
          %p440 = pneg %p132
        $region46: #{tpu_custom_call.1} parent=27 // pred_check_branch
          %442 = sbr.rel (%p440) target = $region48
        $region47: #{tpu_custom_call.1} parent=27 // pred_region
          %s443 = sld [smem:[#allocation3 + %s47]]
          %s445 = ssub.s32 128, 128
          %446 = vsyncadd %s436, %s445
          %s447 = sadd.s32 %s46, %s443
          %s448 = smul.addr %s447, 128
          %s449 = scalar_lea.hbm %s6, %s448
          %s451 = sshll.u32 %s439, 4
          %s452 = int_to_ptr.vmem [resolvable:$true] %s451
          %454 = dma.vmem_to_hbm [thread:$0]  %s452, 128, %s449, %s436
        $region48: #{tpu_custom_call.1} parent=27 // pred_fallthru
          _
      $region28: #{tpu_custom_call.1} parent=5 // pred_fallthru
        _
      %p455 = scmp.le.s32.totalorder 2, %s37
      // Predicated region
      $region49: #{tpu_custom_call.1} parent=5 // pred_check
        %p456 = pneg %p455
      $region50: #{tpu_custom_call.1} parent=5 // pred_check_branch
        %458 = sbr.rel (%p456) target = $region52
      $region51: #{tpu_custom_call.1} parent=5 // pred_region
        %s459 = ssub.s32 %s37, 2
        // Predicated region
        $region53: #{tpu_custom_call.1} parent=51 // pred_check
          %p460 = pneg %p138
        $region54: #{tpu_custom_call.1} parent=51 // pred_check_branch
          %462 = sbr.rel (%p460) target = $region56
        $region55: #{tpu_custom_call.1} parent=51 // pred_region
          %s463 = sand.u32 %s123, 1
          %s464 = scalar_lea.sflag [#allocation9], %s463
          %s465 = sand.u32 %s123, 1
          %s466 = smul.addr %s465, 8
          %s467 = scalar_lea.vmem [#allocation12], %s466
          %468 = dma.done %s464, 128
        $region56: #{tpu_custom_call.1} parent=51 // pred_fallthru
          _
      $region52: #{tpu_custom_call.1} parent=5 // pred_fallthru
        _
    $region6: #{tpu_custom_call.1} parent=1 // loop_footer
      %s41 = sadd.s32 1, %s37
    $region7: #{tpu_custom_call.1} parent=1 // loop_footer_branch
      %36 = sbr.rel target = $region3
    $region8: #{tpu_custom_call.1} parent=1 // loop_exit
      _
    %469 = vsyncpa [#allocation8], 1
    %s470 = scalar_lea.sflag [#allocation8], 1
    %471 = vsyncpa %s470, 1
    %472 = vsyncpa [#allocation11], 1
    %s473 = scalar_lea.sflag [#allocation11], 1
    %474 = vsyncpa %s473, 1
    %475 = vsyncpa [#allocation9], 1
    %s476 = scalar_lea.sflag [#allocation9], 1
    %477 = vsyncpa %s476, 1

</llo_original>
